<compile_context>
chip_gen: v7x
topology: tpu7x:2x2x1
jax: 0.10.0
libtpu: 0.0.40
codegen_flags: <defaults>
</compile_context>

<pallas_src>
import functools

import jax
import jax.numpy as jnp
from jax import lax
from jax.experimental import pallas as pl
from jax.experimental.pallas import tpu as pltpu


H1, H2, OUT = 30, 20, 4          # hidden sizes and output size of the module
LANES = 128                      # lane width of the packed parameter slabs


def _round_up(n, m):
    return (n + m - 1) // m * m


def _param_layout(input_size):
    """Row offsets of each tile-aligned slab inside the packed (rows, 128) buffer."""
    dp = _round_up(input_size, 8)
    off_w1 = 0                   # W1 slab: (dp, 128)   real data [:input_size, :H1]
    off_w2 = off_w1 + dp         # W2 slab: (128, 128)  real data [:H1, :H2]
    off_w3 = off_w2 + LANES      # W3 slab: (128, 128)  real data [:H2, :OUT]
    off_b1 = off_w3 + LANES      # b1: 1 row (full 128 lanes, zero-padded)
    off_b2 = off_b1 + 8          # b2: 1 row
    off_b3 = off_b2 + 8          # b3: 1 row
    rows = off_b3 + 8
    return off_w1, off_w2, off_w3, off_b1, off_b2, off_b3, rows


# ----------------------------- Pallas kernel ------------------------------ #
def _make_kernel(dp, layout):
    off_w1, off_w2, off_w3, off_b1, off_b2, off_b3, _ = layout

    def kernel(x_ref, p_ref, o_ref):
        """One batch tile: (TB, dp) states -> (TB, 4) action probabilities."""
        x = x_ref[...]                                          # (TB, dp) f32

        # Layer 1: Linear(D, 30) + ReLU  (lane-dense, zero-padded to 128 wide)
        w1 = p_ref[off_w1:off_w1 + dp, :]                       # (dp, 128)
        b1 = p_ref[off_b1:off_b1 + 1, :]                        # (1, 128)
        h1 = jnp.dot(x, w1, preferred_element_type=jnp.float32)
        h1 = jnp.maximum(h1 + b1, 0.0)                          # (TB, 128); lanes >= 30 stay 0

        # Layer 2: Linear(30, 20) + ReLU
        w2 = p_ref[off_w2:off_w2 + LANES, :]                    # (128, 128)
        b2 = p_ref[off_b2:off_b2 + 1, :]
        h2 = jnp.dot(h1, w2, preferred_element_type=jnp.float32)
        h2 = jnp.maximum(h2 + b2, 0.0)                          # (TB, 128); lanes >= 20 stay 0

        # Layer 3: Linear(20, 4)
        w3 = p_ref[off_w3:off_w3 + LANES, :]                    # (128, 128)
        b3 = p_ref[off_b3:off_b3 + 1, :]
        logits = jnp.dot(h2, w3, preferred_element_type=jnp.float32) + b3   # (TB, 128)

        # Per-sample softmax over the first 4 lanes only (== Softmax(dim=0) on a
        # 1-D state).  Padded lanes are masked to -inf so exp() makes them 0.
        col = lax.broadcasted_iota(jnp.int32, logits.shape, 1)
        masked = jnp.where(col < OUT, logits, -jnp.inf)
        m = jnp.max(masked, axis=-1, keepdims=True)
        e = jnp.exp(masked - m)
        denom = jnp.sum(e, axis=-1, keepdims=True)
        probs = e / denom                                       # exact divide
        o_ref[...] = probs[:, :OUT]

    return kernel


# ------------------------------ host wrapper ------------------------------ #
def _unpack(packed, input_size):
    off_w1, off_w2, off_w3, off_b1, off_b2, off_b3, _ = _param_layout(input_size)
    w1 = packed[off_w1:off_w1 + input_size, :H1]
    w2 = packed[off_w2:off_w2 + H1, :H2]
    w3 = packed[off_w3:off_w3 + H2, :OUT]
    b1 = packed[off_b1, :H1]
    b2 = packed[off_b2, :H2]
    b3 = packed[off_b3, :OUT]
    return w1, b1, w2, b2, w3, b3


def _single_forward(x, packed):
    """Fast path for a single 1-D state: plain jnp (no pallas_call launch cost)."""
    w1, b1, w2, b2, w3, b3 = _unpack(packed, x.shape[0])
    hp = jax.lax.Precision.HIGHEST
    h1 = jnp.maximum(jnp.dot(x, w1, precision=hp) + b1, 0.0)
    h2 = jnp.maximum(jnp.dot(h1, w2, precision=hp) + b2, 0.0)
    logits = jnp.dot(h2, w3, precision=hp) + b3
    return jax.nn.softmax(logits, axis=0)        # Softmax(dim=0) on the 1-D state


@functools.partial(jax.jit, static_argnames=("block_b",))
def network_forward(x, packed_params, *, block_b=2048):
    """x: (B, input_size) or (input_size,) f32 -> (B, 4) or (4,) probabilities."""
    x = x.astype(jnp.float32)

    if x.ndim == 1:
        # Single-state RL inner-loop path: Pallas launch/DMA overhead >> 3 KFLOPs.
        return _single_forward(x, packed_params)

    B, D = x.shape
    layout = _param_layout(D)
    rows = layout[-1]
    dp = _round_up(D, 8)
    assert packed_params.shape == (rows, LANES)

    # Batch tile: multiple of 8, large enough to amortize per-step overhead, but
    # capped at ~half the batch so the grid has >= 2 steps (megacore on v7x).
    b_al = _round_up(B, 8)
    tb = max(8, min(_round_up(block_b, 8), _round_up(max(b_al // 2, 8), 8)))
    b_pad = _round_up(B, tb)

    # Pad features to a sublane multiple and batch to the tile size.
    x = jnp.pad(x, ((0, b_pad - B), (0, dp - D)))

    out = pl.pallas_call(
        _make_kernel(dp, layout),
        out_shape=jax.ShapeDtypeStruct((b_pad, OUT), jnp.float32),
        grid=(b_pad // tb,),
        in_specs=[
            pl.BlockSpec((tb, dp), lambda i: (i, 0)),           # batch tile of states
            pl.BlockSpec((rows, LANES), lambda i: (0, 0)),      # params: VMEM-resident
        ],
        out_specs=pl.BlockSpec((tb, OUT), lambda i: (i, 0)),
        compiler_params=pltpu.CompilerParams(
            dimension_semantics=("parallel",),                  # megacore on v7x
            vmem_limit_bytes=64 * 1024 * 1024),                 # room for big tiles on v5e
    )(x, packed_params)

    return out[:B]


# --------------------------- parameter creation ---------------------------- #
def init_params(key, input_size):
    """torch.nn.Linear-style init: U(-k, k), k = 1/sqrt(fan_in).

    Weights stored transposed vs. PyTorch, i.e. (in_features, out_features);
    biases stored as (out_features,).
    """
    sizes = [(input_size, H1), (H1, H2), (H2, OUT)]
    params = []
    for fan_in, fan_out in sizes:
        key, kw, kb = jax.random.split(key, 3)
        bound = 1.0 / (fan_in ** 0.5)
        w = jax.random.uniform(kw, (fan_in, fan_out), jnp.float32, -bound, bound)
        b = jax.random.uniform(kb, (fan_out,), jnp.float32, -bound, bound)
        params += [w, b]
    return tuple(params)


def pack_params(params, input_size):
    """Pack W1,W2,W3,b1,b2,b3 into one tile-aligned, zero-padded (rows, 128) slab."""
    w1, b1, w2, b2, w3, b3 = params
    off_w1, off_w2, off_w3, off_b1, off_b2, off_b3, rows = _param_layout(input_size)
    buf = jnp.zeros((rows, LANES), jnp.float32)
    buf = buf.at[off_w1:off_w1 + input_size, :H1].set(w1)
    buf = buf.at[off_w2:off_w2 + H1, :H2].set(w2)
    buf = buf.at[off_w3:off_w3 + H2, :OUT].set(w3)
    buf = buf.at[off_b1, :H1].set(b1)
    buf = buf.at[off_b2, :H2].set(b2)
    buf = buf.at[off_b3, :OUT].set(b3)
    return buf


# Pure-JAX reference (batched) for correctness checking.
def _ref_forward(x, params):
    w1, b1, w2, b2, w3, b3 = params
    hp = jax.lax.Precision.HIGHEST
    h1 = jnp.maximum(jnp.dot(x, w1, precision=hp) + b1, 0.0)
    h2 = jnp.maximum(jnp.dot(h1, w2, precision=hp) + b2, 0.0)
    logits = jnp.dot(h2, w3, precision=hp) + b3
    return jax.nn.softmax(logits, axis=-1)


if __name__ == "__main__":
    input_size = 32
    batch = 200                         # deliberately not a multiple of the tile
    key = jax.random.PRNGKey(0)
    key, kx = jax.random.split(key)

    params = init_params(key, input_size)
    packed = pack_params(params, input_size)

    x_batch = jax.random.normal(kx, (batch, input_size), jnp.float32)

    # Batched path: 2-step grid (tb = 104), weights VMEM-resident across steps.
    out = jax.block_until_ready(network_forward(x_batch, packed))
    ref = _ref_forward(x_batch, params)
    assert out.shape == (batch, 4)
    assert jnp.allclose(out, ref, atol=1e-4, rtol=1e-4), float(jnp.max(jnp.abs(out - ref)))
    assert jnp.allclose(jnp.sum(out, axis=-1), 1.0, atol=1e-5)

    # Single-state path (original PyTorch usage: 1-D state, Softmax(dim=0)).
    out1 = jax.block_until_ready(network_forward(x_batch[0], packed))
    assert out1.shape == (4,)
    assert jnp.allclose(out1, ref[0], atol=1e-4, rtol=1e-4)

    print("KERNEL_OK")
</pallas_src>

<mosaic_0001>
module attributes {stable_mosaic.version = 11 : i64} {
  func.func @kernel(%arg0: i32, %arg1: memref<104x32xf32, #tpu.memory_space<vmem>>, %arg2: memref<312x128xf32, #tpu.memory_space<vmem>>, %arg3: memref<104x4xf32, #tpu.memory_space<vmem>>) attributes {dimension_semantics = [#tpu.dimension_semantics<parallel>], iteration_bounds = array<i64: 2>, scalar_prefetch = 0 : i64, scratch_operands = 0 : i64, tpu.core_type = #tpu.core_type<tc>, window_params = [{transform_indices = @transform_0, window_bounds = array<i64: 104, 32>}, {pipeline_mode = #tpu.pipeline_mode<synchronous>, transform_indices = @transform_1, window_bounds = array<i64: 312, 128>}, {transform_indices = @transform_2, window_bounds = array<i64: 104, 4>}]} {
    %c0 = arith.constant 0 : index
    %c0_0 = arith.constant 0 : index
    %0 = vector.load %arg1[%c0, %c0_0] : memref<104x32xf32, #tpu.memory_space<vmem>>, vector<104x32xf32>
    %c0_1 = arith.constant 0 : index
    %c0_2 = arith.constant 0 : index
    %1 = vector.load %arg2[%c0_1, %c0_2] : memref<312x128xf32, #tpu.memory_space<vmem>>, vector<32x128xf32>
    %c288 = arith.constant 288 : index
    %c0_3 = arith.constant 0 : index
    %2 = vector.load %arg2[%c288, %c0_3] : memref<312x128xf32, #tpu.memory_space<vmem>>, vector<1x128xf32>
    %cst = arith.constant dense<0.000000e+00> : vector<104x128xf32>
    %3 = tpu.matmul %0, %1, %cst {dimension_numbers = #tpu.dot_dimension_numbers<[1], [0], [0], [1], [0, 0, 1, 1], [], []>} : vector<104x32xf32>, vector<32x128xf32>, vector<104x128xf32> -> vector<104x128xf32>
    %4 = vector.broadcast %2 : vector<1x128xf32> to vector<104x128xf32>
    %5 = arith.addf %3, %4 : vector<104x128xf32>
    %cst_4 = arith.constant 0.000000e+00 : f32
    %6 = vector.broadcast %cst_4 : f32 to vector<104x128xf32>
    %7 = arith.maximumf %5, %6 : vector<104x128xf32>
    %c32 = arith.constant 32 : index
    %c0_5 = arith.constant 0 : index
    %8 = vector.load %arg2[%c32, %c0_5] : memref<312x128xf32, #tpu.memory_space<vmem>>, vector<128x128xf32>
    %c296 = arith.constant 296 : index
    %c0_6 = arith.constant 0 : index
    %9 = vector.load %arg2[%c296, %c0_6] : memref<312x128xf32, #tpu.memory_space<vmem>>, vector<1x128xf32>
    %cst_7 = arith.constant dense<0.000000e+00> : vector<104x128xf32>
    %10 = tpu.matmul %7, %8, %cst_7 {dimension_numbers = #tpu.dot_dimension_numbers<[1], [0], [0], [1], [0, 0, 1, 1], [], []>} : vector<104x128xf32>, vector<128x128xf32>, vector<104x128xf32> -> vector<104x128xf32>
    %11 = vector.broadcast %9 : vector<1x128xf32> to vector<104x128xf32>
    %12 = arith.addf %10, %11 : vector<104x128xf32>
    %cst_8 = arith.constant 0.000000e+00 : f32
    %13 = vector.broadcast %cst_8 : f32 to vector<104x128xf32>
    %14 = arith.maximumf %12, %13 : vector<104x128xf32>
    %c160 = arith.constant 160 : index
    %c0_9 = arith.constant 0 : index
    %15 = vector.load %arg2[%c160, %c0_9] : memref<312x128xf32, #tpu.memory_space<vmem>>, vector<128x128xf32>
    %c304 = arith.constant 304 : index
    %c0_10 = arith.constant 0 : index
    %16 = vector.load %arg2[%c304, %c0_10] : memref<312x128xf32, #tpu.memory_space<vmem>>, vector<1x128xf32>
    %cst_11 = arith.constant dense<0.000000e+00> : vector<104x128xf32>
    %17 = tpu.matmul %14, %15, %cst_11 {dimension_numbers = #tpu.dot_dimension_numbers<[1], [0], [0], [1], [0, 0, 1, 1], [], []>} : vector<104x128xf32>, vector<128x128xf32>, vector<104x128xf32> -> vector<104x128xf32>
    %18 = vector.broadcast %16 : vector<1x128xf32> to vector<104x128xf32>
    %19 = arith.addf %17, %18 : vector<104x128xf32>
    %20 = tpu.iota {dimensions = array<i32: 1>} : vector<104x128xi32>
    %c4_i32 = arith.constant 4 : i32
    %21 = vector.broadcast %c4_i32 : i32 to vector<104x128xi32>
    %22 = arith.cmpi slt, %20, %21 : vector<104x128xi32>
    %cst_12 = arith.constant 0xFF800000 : f32
    %23 = vector.broadcast %cst_12 : f32 to vector<104x128xf32>
    %24 = arith.select %22, %19, %23 : vector<104x128xi1>, vector<104x128xf32>
    %cst_13 = arith.constant dense<0xFF800000> : vector<104xf32>
    %25 = vector.multi_reduction <maximumf>, %24, %cst_13 [1] : vector<104x128xf32> to vector<104xf32>
    %26 = vector.shape_cast %25 : vector<104xf32> to vector<104x1xf32>
    %27 = vector.broadcast %26 : vector<104x1xf32> to vector<104x128xf32>
    %28 = arith.subf %24, %27 : vector<104x128xf32>
    %29 = math.exp %28 : vector<104x128xf32>
    %cst_14 = arith.constant dense<0.000000e+00> : vector<104xf32>
    %30 = vector.multi_reduction <add>, %29, %cst_14 [1] : vector<104x128xf32> to vector<104xf32>
    %31 = vector.shape_cast %30 : vector<104xf32> to vector<104x1xf32>
    %32 = vector.broadcast %31 : vector<104x1xf32> to vector<104x128xf32>
    %33 = arith.divf %29, %32 : vector<104x128xf32>
    %34 = vector.extract_strided_slice %33 {offsets = [0, 0], sizes = [104, 4], strides = [1, 1]} : vector<104x128xf32> to vector<104x4xf32>
    %c0_15 = arith.constant 0 : index
    %c0_16 = arith.constant 0 : index
    %35 = vector.load %arg3[%c0_15, %c0_16] : memref<104x4xf32, #tpu.memory_space<vmem>>, vector<104x4xf32>
    tpu.vector_store %arg3[%c0_15, %c0_16], %34 {strides = array<i32>} : memref<104x4xf32, #tpu.memory_space<vmem>>, vector<104x4xf32>,
    return
  }
  func.func @transform_0(%arg0: i32) -> (i32, i32) {
    %c0_i32 = arith.constant 0 : i32
    %c0_i32_0 = arith.constant 0 : i32
    return %arg0, %c0_i32 : i32, i32
  }
  func.func @transform_1(%arg0: i32) -> (i32, i32) {
    %c0_i32 = arith.constant 0 : i32
    %c0_i32_0 = arith.constant 0 : i32
    %c0_i32_1 = arith.constant 0 : i32
    return %c0_i32, %c0_i32_0 : i32, i32
  }
  func.func @transform_2(%arg0: i32) -> (i32, i32) {
    %c0_i32 = arith.constant 0 : i32
    %c0_i32_0 = arith.constant 0 : i32
    return %arg0, %c0_i32 : i32, i32
  }
}

</mosaic_0001>

<llo_original>
// kernel: network_forward.1
$region0: #{network_forward.1}
  #allocation0 [shape = 'u32[]', space=smem, size = 0x4, offset = 0x4, fixed_abs, tag = 'smem constant byte address 0x4 - core index']
  #allocation1 [shape = 'u32[144,128]{1,0:T(1,128)}', space=vmem, size = 0x12000, scoped, tag = 'internal scratch']
  %s0 = inlined_call_operand.hbm [shape: f32[208,32], index: 0, kind: input, shape index: {}]
  %s1 = inlined_call_operand.hbm [shape: f32[312,128], index: 1, kind: input, shape index: {}]
  %s2 = inlined_call_operand.hbm [shape: f32[208,4], index: 2, kind: output, shape index: {}]
  %s3 = sld [smem:[#allocation0]]
  $region49: #{network_forward.1} parent=0
    _
  %s5 = ssub.s32 1, %s3
  %s6 = scalar_select 0, %s5, %s3
  $region1: #{network_forward.1} parent=0
    #allocation2 [shape = 'u8[106496]{0}', space=vmem, size = 0x1a000, scoped, tag = 'input window, operand 0']
    #allocation3 [shape = 's32[2]{0}', space=sflag, size = 0x8, scoped, tag = 'scoped memory for network_forward.1']
    #allocation4 [shape = 's32[2]{0}', space=sflag, size = 0x8, scoped, tag = 'scoped memory for network_forward.1']
    #allocation5 [shape = 'u8[159744]{0}', space=vmem, size = 0x27000, scoped, tag = 'input window, operand 1, single buffered']
    #allocation6 [shape = 's32[1]{0}', space=sflag, size = 0x4, scoped, tag = 'scoped memory for network_forward.1']
    #allocation7 [shape = 'u8[106496]{0}', space=vmem, size = 0x1a000, scoped, tag = 'output window, operand 0']
    %7 = vsyncpa [#allocation3], 0
    %s8 = scalar_lea.sflag [#allocation3], 1
    %9 = vsyncpa %s8, 0
    %10 = vsyncpa [#allocation6], 0
    %11 = vsyncpa [#allocation4], 0
    %s12 = scalar_lea.sflag [#allocation4], 1
    %13 = vsyncpa %s12, 0
    loop: start=0, step=1, limit=4
    $region2: #{network_forward.1} parent=1 // loop_pre_header
      _
    $region3: #{network_forward.1} parent=1 // loop_header
      %s15 = sphi 0, %s19
      %p16 = scmp.ge.s32.totalorder %s15, 4
      %s25 = sphi 0, %s27
      %s28 = sphi 0, %s25
      %s29 = sphi 0, %s28
      %s45 = sphi 0, %s29
      %s49 = sphi 0, %s49
      %s51 = sphi 0, %s49
      %s52 = sphi 0, %s51
      %s66 = sphi 0, %s52
      %s72 = sphi 0, %s74
      %s75 = sphi 0, %s72
      %s76 = sphi 0, %s75
      %s92 = sphi 0, %s76
    $region4: #{network_forward.1} parent=1 // loop_header_branch
      %18 = sbr.rel (%p16) target = $region8
    $region5: #{network_forward.1} parent=1 // loop_body
      %s20 = ssub.s32 %s15, 1
      %s21 = ssub.s32 %s15, 2
      %s22 = sadd.s32 %s15, 1
      %s23 = ssub.s32 %s15, %s22
      %p24 = scmp.eq.s32.totalorder %s23, 0
      %s26 = sadd.s32 %s25, 1
      %s27 = scalar_select %p24, %s25, %s26
      %p30 = pneg %p24
      %p31 = scmp.eq.s32.totalorder %s15, 1
      %p32 = por %p30, %p31
      %p33 = scmp.ne.s32.totalorder %s25, %s28
      %p34 = scmp.eq.s32.totalorder %s15, 0
      %p35 = por %p33, %p34
      %p36 = scmp.ne.s32.totalorder %s25, %s28
      %p37 = scmp.eq.s32.totalorder %s20, 1
      %p38 = por %p36, %p37
      %p39 = scmp.ne.s32.totalorder %s28, %s29
      %p40 = scmp.eq.s32.totalorder %s20, 0
      %p41 = por %p39, %p40
      %p42 = scmp.ne.s32.totalorder %s28, %s29
      %p43 = scmp.eq.s32.totalorder %s21, 1
      %p44 = por %p42, %p43
      %p46 = scmp.ne.s32.totalorder %s29, %s45
      %p47 = scmp.eq.s32.totalorder %s21, 0
      %p48 = por %p46, %p47
      %s50 = sadd.s32 %s49, 1
      %p53 = scmp.eq.s32.totalorder %s15, 1
      %p54 = scmp.ne.s32.totalorder %s49, %s51
      %p55 = scmp.eq.s32.totalorder %s15, 0
      %p56 = por %p54, %p55
      %p57 = scmp.ne.s32.totalorder %s49, %s51
      %p58 = scmp.eq.s32.totalorder %s20, 1
      %p59 = por %p57, %p58
      %p60 = scmp.ne.s32.totalorder %s51, %s52
      %p61 = scmp.eq.s32.totalorder %s20, 0
      %p62 = por %p60, %p61
      %p63 = scmp.ne.s32.totalorder %s51, %s52
      %p64 = scmp.eq.s32.totalorder %s21, 1
      %p65 = por %p63, %p64
      %p67 = scmp.ne.s32.totalorder %s52, %s66
      %p68 = scmp.eq.s32.totalorder %s21, 0
      %p69 = por %p67, %p68
      %s70 = ssub.s32 %s15, %s22
      %p71 = scmp.eq.s32.totalorder %s70, 0
      %s73 = sadd.s32 %s72, 1
      %s74 = scalar_select %p71, %s72, %s73
      %p77 = pneg %p71
      %p78 = scmp.eq.s32.totalorder %s15, 1
      %p79 = por %p77, %p78
      %p80 = scmp.ne.s32.totalorder %s72, %s75
      %p81 = scmp.eq.s32.totalorder %s15, 0
      %p82 = por %p80, %p81
      %p83 = scmp.ne.s32.totalorder %s72, %s75
      %p84 = scmp.eq.s32.totalorder %s20, 1
      %p85 = por %p83, %p84
      %p86 = scmp.ne.s32.totalorder %s75, %s76
      %p87 = scmp.eq.s32.totalorder %s20, 0
      %p88 = por %p86, %p87
      %p89 = scmp.ne.s32.totalorder %s75, %s76
      %p90 = scmp.eq.s32.totalorder %s21, 1
      %p91 = por %p89, %p90
      %p93 = scmp.ne.s32.totalorder %s76, %s92
      %p94 = scmp.eq.s32.totalorder %s21, 0
      %p95 = por %p93, %p94
      %p96 = scmp.le.s32.totalorder 1, %s15
      %p97 = scmp.lt.s32.totalorder %s15, 3
      %p98 = pnand %p96, %p97
      %p99 = pneg %p98
      // Predicated region
      $region9: #{network_forward.1} parent=5 // pred_check
        _
      $region10: #{network_forward.1} parent=5 // pred_check_branch
        %101 = sbr.rel (%p98) target = $region12
      $region11: #{network_forward.1} parent=5 // pred_region
        %s102 = ssub.s32 %s15, 1
        // Predicated region
        $region13: #{network_forward.1} parent=11 // pred_check
          %p103 = pneg %p62
        $region14: #{network_forward.1} parent=11 // pred_check_branch
          %105 = sbr.rel (%p103) target = $region16
        $region15: #{network_forward.1} parent=11 // pred_region
          %s107 = ssub.s32 4992, 4992
          %108 = vsyncadd [#allocation6], %s107
          %s109 = sshll.u32 [#allocation5], 4
          %s110 = int_to_ptr.vmem [resolvable:$true] %s109
          %115 = dma.hbm_to_vmem [thread:$0]  %s1, 4992, %s110, [#allocation6], 128, 128, 8
        $region16: #{network_forward.1} parent=11 // pred_fallthru
          _
      $region12: #{network_forward.1} parent=5 // pred_fallthru
        _
      %p116 = scmp.lt.s32.totalorder %s15, 2
      // Predicated region
      $region17: #{network_forward.1} parent=5 // pred_check
        %p117 = pneg %p116
      $region18: #{network_forward.1} parent=5 // pred_check_branch
        %119 = sbr.rel (%p117) target = $region20
      $region19: #{network_forward.1} parent=5 // pred_region
        // Predicated region
        $region21: #{network_forward.1} parent=19 // pred_check
          %p120 = pneg %p35
        $region22: #{network_forward.1} parent=19 // pred_check_branch
          %122 = sbr.rel (%p120) target = $region24
        $region23: #{network_forward.1} parent=19 // pred_region
          %s123 = sand.u32 %s25, 1
          %s124 = scalar_lea.sflag [#allocation3], %s123
          %s125 = sand.u32 %s25, 1
          %s126 = smul.addr %s125, 104
          %s127 = scalar_lea.vmem [#allocation2], %s126
          %s128 = smul.u32 13, %s15
          %s130 = ssub.s32 1664, 1664
          %131 = vsyncadd %s124, %s130
          %s132 = smul.addr %s128, 128
          %s133 = scalar_lea.hbm %s0, %s132
          %s134 = sshll.u32 %s127, 4
          %s135 = int_to_ptr.vmem [resolvable:$true] %s134
          %140 = dma.hbm_to_vmem [thread:$0]  %s133, 1664, %s135, %s124, 128, 128, 8
        $region24: #{network_forward.1} parent=19 // pred_fallthru
          _
      $region20: #{network_forward.1} parent=5 // pred_fallthru
        _
      %p141 = scmp.le.s32.totalorder 1, %s15
      %p142 = scmp.lt.s32.totalorder %s15, 3
      %p143 = pnand %p141, %p142
      %p144 = pneg %p143
      // Predicated region
      $region25: #{network_forward.1} parent=5 // pred_check
        _
      $region26: #{network_forward.1} parent=5 // pred_check_branch
        %146 = sbr.rel (%p143) target = $region28
      $region27: #{network_forward.1} parent=5 // pred_region
        %s147 = ssub.s32 %s15, 1
        %s148 = sand.u32 %s28, 1
        %s149 = scalar_lea.sflag [#allocation3], %s148
        %s150 = sand.u32 %s28, 1
        %s151 = smul.addr %s150, 104
        %s152 = scalar_lea.vmem [#allocation2], %s151
        // Predicated region
        $region29: #{network_forward.1} parent=27 // pred_check
          %p153 = pneg %p41
        $region30: #{network_forward.1} parent=27 // pred_check_branch
          %155 = sbr.rel (%p153) target = $region32
        $region31: #{network_forward.1} parent=27 // pred_region
          %156 = dma.done %s149, 1664
        $region32: #{network_forward.1} parent=27 // pred_fallthru
          _
        // Predicated region
        $region33: #{network_forward.1} parent=27 // pred_check
          %p157 = pneg %p62
        $region34: #{network_forward.1} parent=27 // pred_check_branch
          %159 = sbr.rel (%p157) target = $region36
        $region35: #{network_forward.1} parent=27 // pred_region
          %160 = dma.done [#allocation6], 4992
        $region36: #{network_forward.1} parent=27 // pred_fallthru
          _
        %s161 = sand.u32 %s28, 1
        %s162 = scalar_lea.sflag [#allocation3], %s161
        %s163 = sand.u32 %s28, 1
        %s164 = smul.addr %s163, 104
        %s165 = scalar_lea.vmem [#allocation2], %s164
        %p166 = pneg %p41
        %p167 = pneg %p38
        %p168 = pneg %p62
        %p169 = pneg %p59
        %p170 = pneg %p88
        %p171 = pneg %p85
        %s172 = sand.u32 %s75, 1
        %s173 = scalar_lea.sflag [#allocation4], %s172
        %s174 = sand.u32 %s75, 1
        %s175 = smul.addr %s174, 104
        %s176 = scalar_lea.vmem [#allocation7], %s175
        %s177 = smul.u32 13, %s20
        %s178 = smul.u32 13, %s20
        %v179 = vld [vmem:[%s152] sm:$0xff]
        %v180 = vld [vmem:[%s152 + $0x8] sm:$0xff]
        %v181 = vld [vmem:[%s152 + $0x10] sm:$0xff]
        %v182 = vld [vmem:[%s152 + $0x18] sm:$0xff]
        %v183 = vld [vmem:[%s152 + $0x20] sm:$0xff]
        %v184 = vld [vmem:[%s152 + $0x28] sm:$0xff]
        %v185 = vld [vmem:[%s152 + $0x30] sm:$0xff]
        %v186 = vld [vmem:[%s152 + $0x38] sm:$0xff]
        %v187 = vld [vmem:[%s152 + $0x40] sm:$0xff]
        %v188 = vld [vmem:[%s152 + $0x48] sm:$0xff]
        %v189 = vld [vmem:[%s152 + $0x50] sm:$0xff]
        %v190 = vld [vmem:[%s152 + $0x58] sm:$0xff]
        %v191 = vld [vmem:[%s152 + $0x60] sm:$0xff]
        %v192 = vld [vmem:[#allocation5] sm:$0xff]
        %v193 = vld [vmem:[#allocation5 + $0x8] sm:$0xff]
        %v194 = vld [vmem:[#allocation5 + $0x10] sm:$0xff]
        %v195 = vld [vmem:[#allocation5 + $0x18] sm:$0xff]
        %v196 = vld [vmem:[#allocation5 + $0x120] sm:$0x1]
        %v197 = vlaneseq
        %v198 = vshrl.u32 %v197, 7
        %v199 = vsub.s32 0, %v198
        %v200 = vrot.slane %v196, %v199
        %vm201 = vcmask 261120
        %v203 = vsel %vm201, %v179, 0
        %v206 = vsel %vm201, %v180, 0
        %v209 = vsel %vm201, %v181, 0
        %v212 = vsel %vm201, %v182, 0
        %v215 = vsel %vm201, %v183, 0
        %v218 = vsel %vm201, %v184, 0
        %v221 = vsel %vm201, %v185, 0
        %v224 = vsel %vm201, %v186, 0
        %v227 = vsel %vm201, %v187, 0
        %v230 = vsel %vm201, %v188, 0
        %v233 = vsel %vm201, %v189, 0
        %v236 = vsel %vm201, %v190, 0
        %v239 = vsel %vm201, %v191, 0
        %241 = vmatprep.subr.mxu0 0.0
        %242 = vmatpush1.msra.mxu0 %v192
        %243 = vmatprep.subr.mxu0 0.0
        %244 = vmatpush1.msra.mxu0 %v193
        %245 = vmatprep.subr.mxu0 0.0
        %246 = vmatpush1.msra.mxu0 %v194
        %247 = vmatprep.subr.mxu0 0.0
        %248 = vmatpush1.msra.mxu0 %v195
        %249 = vmatprep.subr.mxu0 0.0
        %250 = vmatpush1.msra.mxu0 0.0
        %251 = vmatprep.subr.mxu0 0.0
        %252 = vmatpush1.msra.mxu0 0.0
        %253 = vmatprep.subr.mxu0 0.0
        %254 = vmatpush1.msra.mxu0 0.0
        %255 = vmatprep.subr.mxu0 0.0
        %256 = vmatpush1.msra.mxu0 0.0
        %257 = vmatprep.subr.mxu0 0.0
        %258 = vmatpush1.msra.mxu0 0.0
        %259 = vmatprep.subr.mxu0 0.0
        %260 = vmatpush1.msra.mxu0 0.0
        %261 = vmatprep.subr.mxu0 0.0
        %262 = vmatpush1.msra.mxu0 0.0
        %263 = vmatprep.subr.mxu0 0.0
        %264 = vmatpush1.msra.mxu0 0.0
        %265 = vmatprep.subr.mxu0 0.0
        %266 = vmatpush1.msra.mxu0 0.0
        %267 = vmatprep.subr.mxu0 0.0
        %268 = vmatpush1.msra.mxu0 0.0
        %269 = vmatprep.subr.mxu0 0.0
        %270 = vmatpush1.msra.mxu0 0.0
        %271 = vmatprep.subr.mxu0 0.0
        %272 = vmatpush1.msra.mxu0 0.0
        %273 = vmatprep.subr.mxu0 0.0
        %274 = vmatpush1.msra.mxu0 0.0
        %275 = vmatprep.subr.mxu0 0.0
        %276 = vmatpush1.msra.mxu0 0.0
        %277 = vmatprep.subr.mxu0 0.0
        %278 = vmatpush1.msra.mxu0 0.0
        %279 = vmatprep.subr.mxu0 0.0
        %280 = vmatpush1.msra.mxu0 0.0
        %281 = vmatprep.subr.mxu0 0.0
        %282 = vmatpush1.msra.mxu0 0.0
        %283 = vmatprep.subr.mxu0 0.0
        %284 = vmatpush1.msra.mxu0 0.0
        %285 = vmatprep.subr.mxu0 0.0
        %286 = vmatpush1.msra.mxu0 0.0
        %287 = vmatprep.subr.mxu0 0.0
        %288 = vmatpush1.msra.mxu0 0.0
        %289 = vmatprep.subr.mxu0 0.0
        %290 = vmatpush1.msra.mxu0 0.0
        %291 = vmatprep.subr.mxu0 0.0
        %292 = vmatpush1.msra.mxu0 0.0
        %293 = vmatprep.subr.mxu0 0.0
        %294 = vmatpush1.msra.mxu0 0.0
        %295 = vmatprep.subr.mxu0 0.0
        %296 = vmatpush1.msra.mxu0 0.0
        %297 = vmatprep.subr.mxu0 0.0
        %298 = vmatpush1.msra.mxu0 0.0
        %299 = vmatprep.subr.mxu0 0.0
        %300 = vmatpush1.msra.mxu0 0.0
        %301 = vmatprep.subr.mxu0 0.0
        %302 = vmatpush1.msra.mxu0 0.0
        %303 = vmatprep.subr.mxu0 0.0
        %304 = vmatpush1.msra.mxu0 0.0
        %305 = vmatprep.mubr.f32.mxu0 0.0
        %306 = vmatmul.mubr.f32.gmra.mrb[0].mxu0 %v203
        %v307 = vpop.f32.mrb[0].mxu0
        %v308 = vadd.f32 %v200, %v307
        %v309 = vpop.f32.mrb[0].mxu0
        %310 = vmatprep.mubr.f32.mxu0 0.0
        %311 = vmatmul.mubr.f32.gmra.mrb[0].mxu0 %v206
        %v312 = vpop.f32.mrb[0].mxu0
        %v313 = vadd.f32 %v200, %v312
        %v314 = vpop.f32.mrb[0].mxu0
        %315 = vmatprep.mubr.f32.mxu0 0.0
        %316 = vmatmul.mubr.f32.gmra.mrb[0].mxu0 %v209
        %v317 = vpop.f32.mrb[0].mxu0
        %v318 = vadd.f32 %v200, %v317
        %v319 = vpop.f32.mrb[0].mxu0
        %320 = vmatprep.mubr.f32.mxu0 0.0
        %321 = vmatmul.mubr.f32.gmra.mrb[0].mxu0 %v212
        %v322 = vpop.f32.mrb[0].mxu0
        %v323 = vadd.f32 %v200, %v322
        %v324 = vpop.f32.mrb[0].mxu0
        %325 = vmatprep.mubr.f32.mxu0 0.0
        %326 = vmatmul.mubr.f32.gmra.mrb[0].mxu0 %v215
        %v327 = vpop.f32.mrb[0].mxu0
        %v328 = vadd.f32 %v200, %v327
        %v329 = vpop.f32.mrb[0].mxu0
        %330 = vmatprep.mubr.f32.mxu0 0.0
        %331 = vmatmul.mubr.f32.gmra.mrb[0].mxu0 %v218
        %v332 = vpop.f32.mrb[0].mxu0
        %v333 = vadd.f32 %v200, %v332
        %v334 = vpop.f32.mrb[0].mxu0
        %335 = vmatprep.mubr.f32.mxu0 0.0
        %336 = vmatmul.mubr.f32.gmra.mrb[0].mxu0 %v221
        %v337 = vpop.f32.mrb[0].mxu0
        %v338 = vadd.f32 %v200, %v337
        %v339 = vpop.f32.mrb[0].mxu0
        %340 = vmatprep.mubr.f32.mxu0 0.0
        %341 = vmatmul.mubr.f32.gmra.mrb[0].mxu0 %v224
        %v342 = vpop.f32.mrb[0].mxu0
        %v343 = vadd.f32 %v200, %v342
        %v344 = vpop.f32.mrb[0].mxu0
        %345 = vmatprep.mubr.f32.mxu0 0.0
        %346 = vmatmul.mubr.f32.gmra.mrb[0].mxu0 %v227
        %v347 = vpop.f32.mrb[0].mxu0
        %v348 = vadd.f32 %v200, %v347
        %v349 = vpop.f32.mrb[0].mxu0
        %350 = vmatprep.mubr.f32.mxu0 0.0
        %351 = vmatmul.mubr.f32.gmra.mrb[0].mxu0 %v230
        %v352 = vpop.f32.mrb[0].mxu0
        %v353 = vadd.f32 %v200, %v352
        %v354 = vpop.f32.mrb[0].mxu0
        %355 = vmatprep.mubr.f32.mxu0 0.0
        %356 = vmatmul.mubr.f32.gmra.mrb[0].mxu0 %v233
        %v357 = vpop.f32.mrb[0].mxu0
        %v358 = vadd.f32 %v200, %v357
        %v359 = vpop.f32.mrb[0].mxu0
        %360 = vmatprep.mubr.f32.mxu0 0.0
        %361 = vmatmul.mubr.f32.gmra.mrb[0].mxu0 %v236
        %v362 = vpop.f32.mrb[0].mxu0
        %v363 = vadd.f32 %v200, %v362
        %v364 = vpop.f32.mrb[0].mxu0
        %365 = vmatprep.mubr.f32.mxu0 0.0
        %366 = vmatmul.mubr.f32.gmra.mrb[0].mxu0 %v239
        %v367 = vpop.f32.mrb[0].mxu0
        %v368 = vadd.f32 %v200, %v367
        %v369 = vpop.f32.mrb[0].mxu0
        %370 = vdwg.mxu0
        %v371 = vmax.f32 %v308, 0.0
        %v372 = vmax.f32 %v313, 0.0
        %v373 = vmax.f32 %v318, 0.0
        %v374 = vmax.f32 %v323, 0.0
        %v375 = vmax.f32 %v328, 0.0
        %v376 = vmax.f32 %v333, 0.0
        %v377 = vmax.f32 %v338, 0.0
        %v378 = vmax.f32 %v343, 0.0
        %v379 = vmax.f32 %v348, 0.0
        %v380 = vmax.f32 %v353, 0.0
        %v381 = vmax.f32 %v358, 0.0
        %v382 = vmax.f32 %v363, 0.0
        %v383 = vmax.f32 %v368, 0.0
        %v384 = vld [vmem:[#allocation5 + $0x20] sm:$0xff]
        %v385 = vld [vmem:[#allocation5 + $0x28] sm:$0xff]
        %v386 = vld [vmem:[#allocation5 + $0x30] sm:$0xff]
        %v387 = vld [vmem:[#allocation5 + $0x38] sm:$0xff]
        %v388 = vld [vmem:[#allocation5 + $0x40] sm:$0xff]
        %v389 = vld [vmem:[#allocation5 + $0x48] sm:$0xff]
        %v390 = vld [vmem:[#allocation5 + $0x50] sm:$0xff]
        %v391 = vld [vmem:[#allocation5 + $0x58] sm:$0xff]
        %v392 = vld [vmem:[#allocation5 + $0x60] sm:$0xff]
        %v393 = vld [vmem:[#allocation5 + $0x68] sm:$0xff]
        %v394 = vld [vmem:[#allocation5 + $0x70] sm:$0xff]
        %v395 = vld [vmem:[#allocation5 + $0x78] sm:$0xff]
        %v396 = vld [vmem:[#allocation5 + $0x80] sm:$0xff]
        %v397 = vld [vmem:[#allocation5 + $0x88] sm:$0xff]
        %v398 = vld [vmem:[#allocation5 + $0x90] sm:$0xff]
        %v399 = vld [vmem:[#allocation5 + $0x98] sm:$0xff]
        %v400 = vld [vmem:[#allocation5 + $0x128] sm:$0x1]
        %v401 = vlaneseq
        %v402 = vshrl.u32 %v401, 7
        %v403 = vsub.s32 0, %v402
        %v404 = vrot.slane %v400, %v403
        %405 = vmatprep.subr.mxu0 0.0
        %406 = vmatpush1.msra.mxu0 %v384
        %407 = vmatprep.subr.mxu0 0.0
        %408 = vmatpush1.msra.mxu0 %v385
        %409 = vmatprep.subr.mxu0 0.0
        %410 = vmatpush1.msra.mxu0 %v386
        %411 = vmatprep.subr.mxu0 0.0
        %412 = vmatpush1.msra.mxu0 %v387
        %413 = vmatprep.subr.mxu0 0.0
        %414 = vmatpush1.msra.mxu0 %v388
        %415 = vmatprep.subr.mxu0 0.0
        %416 = vmatpush1.msra.mxu0 %v389
        %417 = vmatprep.subr.mxu0 0.0
        %418 = vmatpush1.msra.mxu0 %v390
        %419 = vmatprep.subr.mxu0 0.0
        %420 = vmatpush1.msra.mxu0 %v391
        %421 = vmatprep.subr.mxu0 0.0
        %422 = vmatpush1.msra.mxu0 %v392
        %423 = vmatprep.subr.mxu0 0.0
        %424 = vmatpush1.msra.mxu0 %v393
        %425 = vmatprep.subr.mxu0 0.0
        %426 = vmatpush1.msra.mxu0 %v394
        %427 = vmatprep.subr.mxu0 0.0
        %428 = vmatpush1.msra.mxu0 %v395
        %429 = vmatprep.subr.mxu0 0.0
        %430 = vmatpush1.msra.mxu0 %v396
        %431 = vmatprep.subr.mxu0 0.0
        %432 = vmatpush1.msra.mxu0 %v397
        %433 = vmatprep.subr.mxu0 0.0
        %434 = vmatpush1.msra.mxu0 %v398
        %435 = vmatprep.subr.mxu0 0.0
        %436 = vmatpush1.msra.mxu0 %v399
        %437 = vmatprep.subr.mxu0 0.0
        %438 = vmatpush1.msra.mxu0 0.0
        %439 = vmatprep.subr.mxu0 0.0
        %440 = vmatpush1.msra.mxu0 0.0
        %441 = vmatprep.subr.mxu0 0.0
        %442 = vmatpush1.msra.mxu0 0.0
        %443 = vmatprep.subr.mxu0 0.0
        %444 = vmatpush1.msra.mxu0 0.0
        %445 = vmatprep.subr.mxu0 0.0
        %446 = vmatpush1.msra.mxu0 0.0
        %447 = vmatprep.subr.mxu0 0.0
        %448 = vmatpush1.msra.mxu0 0.0
        %449 = vmatprep.subr.mxu0 0.0
        %450 = vmatpush1.msra.mxu0 0.0
        %451 = vmatprep.subr.mxu0 0.0
        %452 = vmatpush1.msra.mxu0 0.0
        %453 = vmatprep.subr.mxu0 0.0
        %454 = vmatpush1.msra.mxu0 0.0
        %455 = vmatprep.subr.mxu0 0.0
        %456 = vmatpush1.msra.mxu0 0.0
        %457 = vmatprep.subr.mxu0 0.0
        %458 = vmatpush1.msra.mxu0 0.0
        %459 = vmatprep.subr.mxu0 0.0
        %460 = vmatpush1.msra.mxu0 0.0
        %461 = vmatprep.subr.mxu0 0.0
        %462 = vmatpush1.msra.mxu0 0.0
        %463 = vmatprep.subr.mxu0 0.0
        %464 = vmatpush1.msra.mxu0 0.0
        %465 = vmatprep.subr.mxu0 0.0
        %466 = vmatpush1.msra.mxu0 0.0
        %467 = vmatprep.subr.mxu0 0.0
        %468 = vmatpush1.msra.mxu0 0.0
        %469 = vmatprep.mubr.f32.mxu0 0.0
        %470 = vmatmul.mubr.f32.gmra.mrb[0].mxu0 %v371
        %v471 = vpop.f32.mrb[0].mxu0
        %v472 = vadd.f32 %v404, %v471
        %v473 = vpop.f32.mrb[0].mxu0
        %474 = vmatprep.mubr.f32.mxu0 0.0
        %475 = vmatmul.mubr.f32.gmra.mrb[0].mxu0 %v372
        %v476 = vpop.f32.mrb[0].mxu0
        %v477 = vadd.f32 %v404, %v476
        %v478 = vpop.f32.mrb[0].mxu0
        %479 = vmatprep.mubr.f32.mxu0 0.0
        %480 = vmatmul.mubr.f32.gmra.mrb[0].mxu0 %v373
        %v481 = vpop.f32.mrb[0].mxu0
        %v482 = vadd.f32 %v404, %v481
        %v483 = vpop.f32.mrb[0].mxu0
        %484 = vmatprep.mubr.f32.mxu0 0.0
        %485 = vmatmul.mubr.f32.gmra.mrb[0].mxu0 %v374
        %v486 = vpop.f32.mrb[0].mxu0
        %v487 = vadd.f32 %v404, %v486
        %v488 = vpop.f32.mrb[0].mxu0
        %489 = vmatprep.mubr.f32.mxu0 0.0
        %490 = vmatmul.mubr.f32.gmra.mrb[0].mxu0 %v375
        %v491 = vpop.f32.mrb[0].mxu0
        %v492 = vadd.f32 %v404, %v491
        %v493 = vpop.f32.mrb[0].mxu0
        %494 = vmatprep.mubr.f32.mxu0 0.0
        %495 = vmatmul.mubr.f32.gmra.mrb[0].mxu0 %v376
        %v496 = vpop.f32.mrb[0].mxu0
        %v497 = vadd.f32 %v404, %v496
        %v498 = vpop.f32.mrb[0].mxu0
        %499 = vmatprep.mubr.f32.mxu0 0.0
        %500 = vmatmul.mubr.f32.gmra.mrb[0].mxu0 %v377
        %v501 = vpop.f32.mrb[0].mxu0
        %v502 = vadd.f32 %v404, %v501
        %v503 = vpop.f32.mrb[0].mxu0
        %504 = vmatprep.mubr.f32.mxu0 0.0
        %505 = vmatmul.mubr.f32.gmra.mrb[0].mxu0 %v378
        %v506 = vpop.f32.mrb[0].mxu0
        %v507 = vadd.f32 %v404, %v506
        %v508 = vpop.f32.mrb[0].mxu0
        %509 = vmatprep.mubr.f32.mxu0 0.0
        %510 = vmatmul.mubr.f32.gmra.mrb[0].mxu0 %v379
        %v511 = vpop.f32.mrb[0].mxu0
        %v512 = vadd.f32 %v404, %v511
        %v513 = vpop.f32.mrb[0].mxu0
        %514 = vmatprep.mubr.f32.mxu0 0.0
        %515 = vmatmul.mubr.f32.gmra.mrb[0].mxu0 %v380
        %v516 = vpop.f32.mrb[0].mxu0
        %v517 = vadd.f32 %v404, %v516
        %v518 = vpop.f32.mrb[0].mxu0
        %519 = vmatprep.mubr.f32.mxu0 0.0
        %520 = vmatmul.mubr.f32.gmra.mrb[0].mxu0 %v381
        %v521 = vpop.f32.mrb[0].mxu0
        %v522 = vadd.f32 %v404, %v521
        %v523 = vpop.f32.mrb[0].mxu0
        %524 = vmatprep.mubr.f32.mxu0 0.0
        %525 = vmatmul.mubr.f32.gmra.mrb[0].mxu0 %v382
        %v526 = vpop.f32.mrb[0].mxu0
        %v527 = vadd.f32 %v404, %v526
        %v528 = vpop.f32.mrb[0].mxu0
        %529 = vmatprep.mubr.f32.mxu0 0.0
        %530 = vmatmul.mubr.f32.gmra.mrb[0].mxu0 %v383
        %v531 = vpop.f32.mrb[0].mxu0
        %v532 = vadd.f32 %v404, %v531
        %v533 = vpop.f32.mrb[0].mxu0
        %534 = vdwg.mxu0
        %v535 = vmax.f32 %v472, 0.0
        %v536 = vmax.f32 %v477, 0.0
        %v537 = vmax.f32 %v482, 0.0
        %v538 = vmax.f32 %v487, 0.0
        %v539 = vmax.f32 %v492, 0.0
        %v540 = vmax.f32 %v497, 0.0
        %v541 = vmax.f32 %v502, 0.0
        %v542 = vmax.f32 %v507, 0.0
        %v543 = vmax.f32 %v512, 0.0
        %v544 = vmax.f32 %v517, 0.0
        %v545 = vmax.f32 %v522, 0.0
        %v546 = vmax.f32 %v527, 0.0
        %v547 = vmax.f32 %v532, 0.0
        %v548 = vld [vmem:[#allocation5 + $0xa0] sm:$0xff]
        %v549 = vld [vmem:[#allocation5 + $0xa8] sm:$0xff]
        %v550 = vld [vmem:[#allocation5 + $0xb0] sm:$0xff]
        %v551 = vld [vmem:[#allocation5 + $0xb8] sm:$0xff]
        %v552 = vld [vmem:[#allocation5 + $0xc0] sm:$0xff]
        %v553 = vld [vmem:[#allocation5 + $0xc8] sm:$0xff]
        %v554 = vld [vmem:[#allocation5 + $0xd0] sm:$0xff]
        %v555 = vld [vmem:[#allocation5 + $0xd8] sm:$0xff]
        %v556 = vld [vmem:[#allocation5 + $0xe0] sm:$0xff]
        %v557 = vld [vmem:[#allocation5 + $0xe8] sm:$0xff]
        %v558 = vld [vmem:[#allocation5 + $0xf0] sm:$0xff]
        %v559 = vld [vmem:[#allocation5 + $0xf8] sm:$0xff]
        %v560 = vld [vmem:[#allocation5 + $0x100] sm:$0xff]
        %v561 = vld [vmem:[#allocation5 + $0x108] sm:$0xff]
        %v562 = vld [vmem:[#allocation5 + $0x110] sm:$0xff]
        %v563 = vld [vmem:[#allocation5 + $0x118] sm:$0xff]
        %v564 = vld [vmem:[#allocation5 + $0x130] sm:$0x1]
        %v565 = vlaneseq
        %v566 = vshrl.u32 %v565, 7
        %v567 = vsub.s32 0, %v566
        %v568 = vrot.slane %v564, %v567
        %569 = vmatprep.subr.mxu0 0.0
        %570 = vmatpush1.msra.mxu0 %v548
        %571 = vmatprep.subr.mxu0 0.0
        %572 = vmatpush1.msra.mxu0 %v549
        %573 = vmatprep.subr.mxu0 0.0
        %574 = vmatpush1.msra.mxu0 %v550
        %575 = vmatprep.subr.mxu0 0.0
        %576 = vmatpush1.msra.mxu0 %v551
        %577 = vmatprep.subr.mxu0 0.0
        %578 = vmatpush1.msra.mxu0 %v552
        %579 = vmatprep.subr.mxu0 0.0
        %580 = vmatpush1.msra.mxu0 %v553
        %581 = vmatprep.subr.mxu0 0.0
        %582 = vmatpush1.msra.mxu0 %v554
        %583 = vmatprep.subr.mxu0 0.0
        %584 = vmatpush1.msra.mxu0 %v555
        %585 = vmatprep.subr.mxu0 0.0
        %586 = vmatpush1.msra.mxu0 %v556
        %587 = vmatprep.subr.mxu0 0.0
        %588 = vmatpush1.msra.mxu0 %v557
        %589 = vmatprep.subr.mxu0 0.0
        %590 = vmatpush1.msra.mxu0 %v558
        %591 = vmatprep.subr.mxu0 0.0
        %592 = vmatpush1.msra.mxu0 %v559
        %593 = vmatprep.subr.mxu0 0.0
        %594 = vmatpush1.msra.mxu0 %v560
        %595 = vmatprep.subr.mxu0 0.0
        %596 = vmatpush1.msra.mxu0 %v561
        %597 = vmatprep.subr.mxu0 0.0
        %598 = vmatpush1.msra.mxu0 %v562
        %599 = vmatprep.subr.mxu0 0.0
        %600 = vmatpush1.msra.mxu0 %v563
        %601 = vmatprep.subr.mxu0 0.0
        %602 = vmatpush1.msra.mxu0 0.0
        %603 = vmatprep.subr.mxu0 0.0
        %604 = vmatpush1.msra.mxu0 0.0
        %605 = vmatprep.subr.mxu0 0.0
        %606 = vmatpush1.msra.mxu0 0.0
        %607 = vmatprep.subr.mxu0 0.0
        %608 = vmatpush1.msra.mxu0 0.0
        %609 = vmatprep.subr.mxu0 0.0
        %610 = vmatpush1.msra.mxu0 0.0
        %611 = vmatprep.subr.mxu0 0.0
        %612 = vmatpush1.msra.mxu0 0.0
        %613 = vmatprep.subr.mxu0 0.0
        %614 = vmatpush1.msra.mxu0 0.0
        %615 = vmatprep.subr.mxu0 0.0
        %616 = vmatpush1.msra.mxu0 0.0
        %617 = vmatprep.subr.mxu0 0.0
        %618 = vmatpush1.msra.mxu0 0.0
        %619 = vmatprep.subr.mxu0 0.0
        %620 = vmatpush1.msra.mxu0 0.0
        %621 = vmatprep.subr.mxu0 0.0
        %622 = vmatpush1.msra.mxu0 0.0
        %623 = vmatprep.subr.mxu0 0.0
        %624 = vmatpush1.msra.mxu0 0.0
        %625 = vmatprep.subr.mxu0 0.0
        %626 = vmatpush1.msra.mxu0 0.0
        %627 = vmatprep.subr.mxu0 0.0
        %628 = vmatpush1.msra.mxu0 0.0
        %629 = vmatprep.subr.mxu0 0.0
        %630 = vmatpush1.msra.mxu0 0.0
        %631 = vmatprep.subr.mxu0 0.0
        %632 = vmatpush1.msra.mxu0 0.0
        %633 = vmatprep.mubr.f32.mxu0 0.0
        %634 = vmatmul.mubr.f32.gmra.mrb[0].mxu0 %v535
        %v635 = vpop.f32.mrb[0].mxu0
        %v636 = vadd.f32 %v568, %v635
        %v637 = vpop.f32.mrb[0].mxu0
        %638 = vmatprep.mubr.f32.mxu0 0.0
        %639 = vmatmul.mubr.f32.gmra.mrb[0].mxu0 %v536
        %v640 = vpop.f32.mrb[0].mxu0
        %v641 = vadd.f32 %v568, %v640
        %v642 = vpop.f32.mrb[0].mxu0
        %643 = vmatprep.mubr.f32.mxu0 0.0
        %644 = vmatmul.mubr.f32.gmra.mrb[0].mxu0 %v537
        %v645 = vpop.f32.mrb[0].mxu0
        %v646 = vadd.f32 %v568, %v645
        %v647 = vpop.f32.mrb[0].mxu0
        %648 = vmatprep.mubr.f32.mxu0 0.0
        %649 = vmatmul.mubr.f32.gmra.mrb[0].mxu0 %v538
        %v650 = vpop.f32.mrb[0].mxu0
        %v651 = vadd.f32 %v568, %v650
        %v652 = vpop.f32.mrb[0].mxu0
        %653 = vmatprep.mubr.f32.mxu0 0.0
        %654 = vmatmul.mubr.f32.gmra.mrb[0].mxu0 %v539
        %v655 = vpop.f32.mrb[0].mxu0
        %v656 = vadd.f32 %v568, %v655
        %v657 = vpop.f32.mrb[0].mxu0
        %658 = vmatprep.mubr.f32.mxu0 0.0
        %659 = vmatmul.mubr.f32.gmra.mrb[0].mxu0 %v540
        %v660 = vpop.f32.mrb[0].mxu0
        %v661 = vadd.f32 %v568, %v660
        %v662 = vpop.f32.mrb[0].mxu0
        %663 = vmatprep.mubr.f32.mxu0 0.0
        %664 = vmatmul.mubr.f32.gmra.mrb[0].mxu0 %v541
        %v665 = vpop.f32.mrb[0].mxu0
        %v666 = vadd.f32 %v568, %v665
        %v667 = vpop.f32.mrb[0].mxu0
        %668 = vmatprep.mubr.f32.mxu0 0.0
        %669 = vmatmul.mubr.f32.gmra.mrb[0].mxu0 %v542
        %v670 = vpop.f32.mrb[0].mxu0
        %v671 = vadd.f32 %v568, %v670
        %v672 = vpop.f32.mrb[0].mxu0
        %673 = vmatprep.mubr.f32.mxu0 0.0
        %674 = vmatmul.mubr.f32.gmra.mrb[0].mxu0 %v543
        %v675 = vpop.f32.mrb[0].mxu0
        %v676 = vadd.f32 %v568, %v675
        %v677 = vpop.f32.mrb[0].mxu0
        %678 = vmatprep.mubr.f32.mxu0 0.0
        %679 = vmatmul.mubr.f32.gmra.mrb[0].mxu0 %v544
        %v680 = vpop.f32.mrb[0].mxu0
        %v681 = vadd.f32 %v568, %v680
        %v682 = vpop.f32.mrb[0].mxu0
        %683 = vmatprep.mubr.f32.mxu0 0.0
        %684 = vmatmul.mubr.f32.gmra.mrb[0].mxu0 %v545
        %v685 = vpop.f32.mrb[0].mxu0
        %v686 = vadd.f32 %v568, %v685
        %v687 = vpop.f32.mrb[0].mxu0
        %688 = vmatprep.mubr.f32.mxu0 0.0
        %689 = vmatmul.mubr.f32.gmra.mrb[0].mxu0 %v546
        %v690 = vpop.f32.mrb[0].mxu0
        %v691 = vadd.f32 %v568, %v690
        %v692 = vpop.f32.mrb[0].mxu0
        %693 = vmatprep.mubr.f32.mxu0 0.0
        %694 = vmatmul.mubr.f32.gmra.mrb[0].mxu0 %v547
        %v695 = vpop.f32.mrb[0].mxu0
        %v696 = vadd.f32 %v568, %v695
        %v697 = vpop.f32.mrb[0].mxu0
        %698 = vdwg.mxu0
        %v699 = vlaneseq
        %v700 = vand.u32 %v699, 127
        %vm701 = vcmp.lt.s32.totalorder %v700, 4
        %v702 = vsel %vm701, %v636, -inf
        %v703 = vsel %vm701, %v641, -inf
        %v704 = vsel %vm701, %v646, -inf
        %v705 = vsel %vm701, %v651, -inf
        %v706 = vsel %vm701, %v656, -inf
        %v707 = vsel %vm701, %v661, -inf
        %v708 = vsel %vm701, %v666, -inf
        %v709 = vsel %vm701, %v671, -inf
        %v710 = vsel %vm701, %v676, -inf
        %v711 = vsel %vm701, %v681, -inf
        %v712 = vsel %vm701, %v686, -inf
        %v713 = vsel %vm701, %v691, -inf
        %v714 = vsel %vm701, %v696, -inf
        %715 = vmax.xlane.f32.xlu0 %v702
        %v716 = vpop.xlane.xlu0 %715
        %717 = vmax.xlane.f32.xlu0 %v703
        %v718 = vpop.xlane.xlu0 %717
        %719 = vmax.xlane.f32.xlu0 %v704
        %v720 = vpop.xlane.xlu0 %719
        %721 = vmax.xlane.f32.xlu0 %v705
        %v722 = vpop.xlane.xlu0 %721
        %723 = vmax.xlane.f32.xlu0 %v706
        %v724 = vpop.xlane.xlu0 %723
        %725 = vmax.xlane.f32.xlu0 %v707
        %v726 = vpop.xlane.xlu0 %725
        %727 = vmax.xlane.f32.xlu0 %v708
        %v728 = vpop.xlane.xlu0 %727
        %729 = vmax.xlane.f32.xlu0 %v709
        %v730 = vpop.xlane.xlu0 %729
        %731 = vmax.xlane.f32.xlu0 %v710
        %v732 = vpop.xlane.xlu0 %731
        %733 = vmax.xlane.f32.xlu0 %v711
        %v734 = vpop.xlane.xlu0 %733
        %735 = vmax.xlane.f32.xlu0 %v712
        %v736 = vpop.xlane.xlu0 %735
        %737 = vmax.xlane.f32.xlu0 %v713
        %v738 = vpop.xlane.xlu0 %737
        %739 = vmax.xlane.f32.xlu0 %v714
        %v740 = vpop.xlane.xlu0 %739
        %v741 = vsub.f32 %v702, %v716
        %v742 = vsub.f32 %v703, %v718
        %v743 = vsub.f32 %v704, %v720
        %v744 = vsub.f32 %v705, %v722
        %v745 = vsub.f32 %v706, %v724
        %v746 = vsub.f32 %v707, %v726
        %v747 = vsub.f32 %v708, %v728
        %v748 = vsub.f32 %v709, %v730
        %v749 = vsub.f32 %v710, %v732
        %v750 = vsub.f32 %v711, %v734
        %v751 = vsub.f32 %v712, %v736
        %v752 = vsub.f32 %v713, %v738
        %v753 = vsub.f32 %v714, %v740
        %v754 = vmul.f32 %v741, 1.442695
        %v755 = vpow.pop %v754
        %v756 = vmul.f32 %v742, 1.442695
        %v757 = vpow.pop %v756
        %v758 = vmul.f32 %v743, 1.442695
        %v759 = vpow.pop %v758
        %v760 = vmul.f32 %v744, 1.442695
        %v761 = vpow.pop %v760
        %v762 = vmul.f32 %v745, 1.442695
        %v763 = vpow.pop %v762
        %v764 = vmul.f32 %v746, 1.442695
        %v765 = vpow.pop %v764
        %v766 = vmul.f32 %v747, 1.442695
        %v767 = vpow.pop %v766
        %v768 = vmul.f32 %v748, 1.442695
        %v769 = vpow.pop %v768
        %v770 = vmul.f32 %v749, 1.442695
        %v771 = vpow.pop %v770
        %v772 = vmul.f32 %v750, 1.442695
        %v773 = vpow.pop %v772
        %v774 = vmul.f32 %v751, 1.442695
        %v775 = vpow.pop %v774
        %v776 = vmul.f32 %v752, 1.442695
        %v777 = vpow.pop %v776
        %v778 = vmul.f32 %v753, 1.442695
        %v779 = vpow.pop %v778
        %780 = vadd.xlane.f32.xlu0 %v755
        %v781 = vpop.xlane.xlu0 %780
        %782 = vadd.xlane.f32.xlu0 %v757
        %v783 = vpop.xlane.xlu0 %782
        %784 = vadd.xlane.f32.xlu0 %v759
        %v785 = vpop.xlane.xlu0 %784
        %786 = vadd.xlane.f32.xlu0 %v761
        %v787 = vpop.xlane.xlu0 %786
        %788 = vadd.xlane.f32.xlu0 %v763
        %v789 = vpop.xlane.xlu0 %788
        %790 = vadd.xlane.f32.xlu0 %v765
        %v791 = vpop.xlane.xlu0 %790
        %792 = vadd.xlane.f32.xlu0 %v767
        %v793 = vpop.xlane.xlu0 %792
        %794 = vadd.xlane.f32.xlu0 %v769
        %v795 = vpop.xlane.xlu0 %794
        %796 = vadd.xlane.f32.xlu0 %v771
        %v797 = vpop.xlane.xlu0 %796
        %798 = vadd.xlane.f32.xlu0 %v773
        %v799 = vpop.xlane.xlu0 %798
        %800 = vadd.xlane.f32.xlu0 %v775
        %v801 = vpop.xlane.xlu0 %800
        %802 = vadd.xlane.f32.xlu0 %v777
        %v803 = vpop.xlane.xlu0 %802
        %804 = vadd.xlane.f32.xlu0 %v779
        %v805 = vpop.xlane.xlu0 %804
        %v806 = vrcp.pop %v781
        %v807 = vmul.f32 %v755, %v806
        %v808 = vrcp.pop %v783
        %v809 = vmul.f32 %v757, %v808
        %v810 = vrcp.pop %v785
        %v811 = vmul.f32 %v759, %v810
        %v812 = vrcp.pop %v787
        %v813 = vmul.f32 %v761, %v812
        %v814 = vrcp.pop %v789
        %v815 = vmul.f32 %v763, %v814
        %v816 = vrcp.pop %v791
        %v817 = vmul.f32 %v765, %v816
        %v818 = vrcp.pop %v793
        %v819 = vmul.f32 %v767, %v818
        %v820 = vrcp.pop %v795
        %v821 = vmul.f32 %v769, %v820
        %v822 = vrcp.pop %v797
        %v823 = vmul.f32 %v771, %v822
        %v824 = vrcp.pop %v799
        %v825 = vmul.f32 %v773, %v824
        %v826 = vrcp.pop %v801
        %v827 = vmul.f32 %v775, %v826
        %v828 = vrcp.pop %v803
        %v829 = vmul.f32 %v777, %v828
        %v830 = vrcp.pop %v805
        %v831 = vmul.f32 %v779, %v830
        %vm832 = vcmask 31744
        %833 = vst.msk [vmem:[%s176] sm:$0xff] %vm832, %v807
        %834 = vst.msk [vmem:[%s176 + $0x8] sm:$0xff] %vm832, %v809
        %835 = vst.msk [vmem:[%s176 + $0x10] sm:$0xff] %vm832, %v811
        %836 = vst.msk [vmem:[%s176 + $0x18] sm:$0xff] %vm832, %v813
        %837 = vst.msk [vmem:[%s176 + $0x20] sm:$0xff] %vm832, %v815
        %838 = vst.msk [vmem:[%s176 + $0x28] sm:$0xff] %vm832, %v817
        %839 = vst.msk [vmem:[%s176 + $0x30] sm:$0xff] %vm832, %v819
        %840 = vst.msk [vmem:[%s176 + $0x38] sm:$0xff] %vm832, %v821
        %841 = vst.msk [vmem:[%s176 + $0x40] sm:$0xff] %vm832, %v823
        %842 = vst.msk [vmem:[%s176 + $0x48] sm:$0xff] %vm832, %v825
        %843 = vst.msk [vmem:[%s176 + $0x50] sm:$0xff] %vm832, %v827
        %844 = vst.msk [vmem:[%s176 + $0x58] sm:$0xff] %vm832, %v829
        %845 = vst.msk [vmem:[%s176 + $0x60] sm:$0xff] %vm832, %v831
        %s846 = sand.u32 %s75, 1
        %s847 = scalar_lea.sflag [#allocation4], %s846
        %s848 = sand.u32 %s75, 1
        %s849 = smul.addr %s848, 104
        %s850 = scalar_lea.vmem [#allocation7], %s849
        // Predicated region
        $region37: #{network_forward.1} parent=27 // pred_check
          %p851 = pneg %p85
        $region38: #{network_forward.1} parent=27 // pred_check_branch
          %853 = sbr.rel (%p851) target = $region40
        $region39: #{network_forward.1} parent=27 // pred_region
          %s854 = smul.u32 13, %s20
          %s856 = ssub.s32 1664, 1664
          %857 = vsyncadd %s847, %s856
          %s858 = smul.addr %s854, 128
          %s859 = scalar_lea.hbm %s2, %s858
          %s860 = sshll.u32 %s850, 4
          %s861 = int_to_ptr.vmem [resolvable:$true] %s860
          %866 = dma.vmem_to_hbm [thread:$0]  %s861, 1664, %s859, %s847, 128, 128, 8
        $region40: #{network_forward.1} parent=27 // pred_fallthru
          _
      $region28: #{network_forward.1} parent=5 // pred_fallthru
        _
      %p867 = scmp.le.s32.totalorder 2, %s15
      // Predicated region
      $region41: #{network_forward.1} parent=5 // pred_check
        %p868 = pneg %p867
      $region42: #{network_forward.1} parent=5 // pred_check_branch
        %870 = sbr.rel (%p868) target = $region44
      $region43: #{network_forward.1} parent=5 // pred_region
        %s871 = ssub.s32 %s15, 2
        // Predicated region
        $region45: #{network_forward.1} parent=43 // pred_check
          %p872 = pneg %p91
        $region46: #{network_forward.1} parent=43 // pred_check_branch
          %874 = sbr.rel (%p872) target = $region48
        $region47: #{network_forward.1} parent=43 // pred_region
          %s875 = sand.u32 %s76, 1
          %s876 = scalar_lea.sflag [#allocation4], %s875
          %s877 = sand.u32 %s76, 1
          %s878 = smul.addr %s877, 104
          %s879 = scalar_lea.vmem [#allocation7], %s878
          %880 = dma.done %s876, 1664
        $region48: #{network_forward.1} parent=43 // pred_fallthru
          _
      $region44: #{network_forward.1} parent=5 // pred_fallthru
        _
    $region6: #{network_forward.1} parent=1 // loop_footer
      %s19 = sadd.s32 1, %s15
    $region7: #{network_forward.1} parent=1 // loop_footer_branch
      %14 = sbr.rel target = $region3
    $region8: #{network_forward.1} parent=1 // loop_exit
      _
    %881 = vsyncpa [#allocation3], 1
    %s882 = scalar_lea.sflag [#allocation3], 1
    %883 = vsyncpa %s882, 1
    %884 = vsyncpa [#allocation6], 1
    %885 = vsyncpa [#allocation4], 1
    %s886 = scalar_lea.sflag [#allocation4], 1
    %887 = vsyncpa %s886, 1

</llo_original>
